<compile_context>
chip_gen: v7x
topology: tpu7x:2x2x1
jax: 0.10.0
libtpu: 0.0.40
codegen_flags: <defaults>
</compile_context>

<pallas_src>
import functools

import jax
import jax.numpy as jnp
from jax.experimental import pallas as pl
from jax.experimental.pallas import tpu as pltpu


def _round_up(x, m):
    return (x + m - 1) // m * m


# VMEM budget for pipeline buffers + scratch used when picking tile sizes.
# Conservative enough for v7x's 64 MiB physical VMEM with headroom.
_VMEM_BUDGET = 24 << 20


def _vmem_estimate_bytes(tm, tk, d, lp):
    """Estimated VMEM for the fused kernel's double-buffered tiles + scratch."""
    return (2 * tm * tk * 2      # x tile         (bf16, 2 buffers)
            + 2 * tk * d * 2     # W_img tile     (bf16, 2 buffers)
            + 2 * lp * d * 4     # text features  (f32, constant block)
            + 2 * lp * 4         # label bias row (f32)
            + 2 * tm * lp * 4    # output tile    (f32, 2 buffers)
            + tm * d * 4)        # f32 accumulator scratch


# ---------------------------------------------------------------------------
# Fused image-encoder + CLIP zero-shot head.
#
# grid = (M_blocks, K_blocks):
#   m ("parallel")  : tiles of the (padded) batch
#   k ("arbitrary") : reduction over the flattened-image dim of x @ W_img
# The [tm, D] image-feature accumulator lives in VMEM scratch; the head runs
# on it at the last k step and writes a lane-dense [tm, L_pad] block.
# ---------------------------------------------------------------------------

def _fused_clip_kernel(x_ref, w_ref, txt_ref, bias_ref, out_ref, acc_ref):
    k = pl.program_id(1)

    @pl.when(k == 0)
    def _():
        acc_ref[...] = jnp.zeros_like(acc_ref)

    # bf16 x bf16 -> f32 accumulation on the MXU.
    acc_ref[...] += jnp.dot(x_ref[...], w_ref[...],
                            preferred_element_type=jnp.float32)

    @pl.when(k == pl.num_programs(1) - 1)
    def _():
        img = acc_ref[...]
        # L2 normalize; epsilon keeps zero-padded batch rows NaN-free.
        inv_norm = jax.lax.rsqrt(
            jnp.sum(img * img, axis=-1, keepdims=True) + 1e-12)
        img_n = img * inv_norm
        # logits = img_n @ (temperature * txt_n).T — temperature was folded
        # into txt at init.  Contract last dims of both operands (no in-kernel
        # transpose / layout copy).
        logits = jax.lax.dot_general(
            img_n, txt_ref[...],
            dimension_numbers=(((1,), (1,)), ((), ())),
            preferred_element_type=jnp.float32)
        # Additive mask for padded label columns (0 real / -1e30 padded).
        logits = logits + bias_ref[...]
        # Softmax over labels.  Exact reciprocal so rows sum to 1.
        m = jnp.max(logits, axis=-1, keepdims=True)
        e = jnp.exp(logits - m)
        denom = jnp.sum(e, axis=-1, keepdims=True)
        out_ref[...] = e * pl.reciprocal(denom, approx=False)


def fused_clip_forward(x_bf16, w_img_bf16, txt_scaled, label_bias, *, tm, tk):
    """x_bf16: [M, K] bf16 (padded), w_img_bf16: [K, D] bf16 (zero-padded),
    txt_scaled: [Lp, D] f32 temperature-scaled + L2-normalized text features,
    label_bias: [1, Lp] f32 additive mask.  Returns probs [M, Lp] f32."""
    M, K = x_bf16.shape
    K2, D = w_img_bf16.shape
    Lp, D2 = txt_scaled.shape
    assert K == K2 and D == D2
    assert M % tm == 0 and K % tk == 0

    est = _vmem_estimate_bytes(tm, tk, D, Lp)
    vmem_limit = int(min(max(2 * est, 32 << 20), 48 << 20))

    return pl.pallas_call(
        _fused_clip_kernel,
        out_shape=jax.ShapeDtypeStruct((M, Lp), jnp.float32),
        grid_spec=pltpu.PrefetchScalarGridSpec(
            num_scalar_prefetch=0,
            grid=(M // tm, K // tk),
            in_specs=[
                pl.BlockSpec((tm, tk), lambda m, k: (m, k)),   # x tile
                pl.BlockSpec((tk, D), lambda m, k: (k, 0)),    # W_img tile
                pl.BlockSpec((Lp, D), lambda m, k: (0, 0)),    # text features
                pl.BlockSpec((1, Lp), lambda m, k: (0, 0)),    # label bias
            ],
            out_specs=pl.BlockSpec((tm, Lp), lambda m, k: (m, 0)),
            scratch_shapes=[pltpu.VMEM((tm, D), jnp.float32)],
        ),
        compiler_params=pltpu.CompilerParams(
            dimension_semantics=("parallel", "arbitrary"),
            vmem_limit_bytes=vmem_limit),
    )(x_bf16, w_img_bf16, txt_scaled, label_bias)


# ---------------------------------------------------------------------------
# Synthetic CLIP classifier (forward pass)
# ---------------------------------------------------------------------------

class CLIPClassifierPallas:
    def __init__(self, key, *, img_chw, embed_dim, num_labels,
                 vocab_size=64, tok_len=8, tok_embed_dim=32):
        C, H, W = img_chw
        K = C * H * W
        k1, k2, k3, k4 = jax.random.split(key, 4)

        # TODO(synk): the real open_clip ViT / text-transformer towers and the
        # tokenizer are external pretrained models; replaced here by
        # deterministic synthetic linear encoders (text tower runs once, at init).
        self.w_img = jax.random.normal(k1, (K, embed_dim), jnp.float32) * 0.02
        self.tok_embed = jax.random.normal(k2, (vocab_size, tok_embed_dim),
                                           jnp.float32) * 0.02
        self.w_txt = jax.random.normal(k3, (tok_embed_dim, embed_dim),
                                       jnp.float32) * 0.2
        self.tokenized_labels = jax.random.randint(
            k4, (num_labels, tok_len), 0, vocab_size, dtype=jnp.int32)
        # temperature parameter = log(1/0.07), same init as the PyTorch module.
        self.logit_scale = jnp.array([jnp.log(1.0 / 0.07)], dtype=jnp.float32)

        self.num_labels = num_labels
        self.K = K
        self.D_pad = _round_up(embed_dim, 128)
        self.L_pad = _round_up(num_labels, 128)

        # K tile: as large as the VMEM budget allows (fewer grid steps, bigger
        # W_img DMAs).  K is padded to a multiple of tk; zero rows are exact.
        K128 = _round_up(K, 128)
        tk = 128
        for cand in (2048, 1024, 512, 256, 128):
            tk = min(cand, K128)
            if _vmem_estimate_bytes(512, tk, self.D_pad,
                                    self.L_pad) <= _VMEM_BUDGET:
                break
        self.tk = tk
        self.K_pad = _round_up(K, tk)

        # Image projection stored as bf16: halves the dominant HBM stream.
        w = jnp.pad(self.w_img,
                    ((0, self.K_pad - K), (0, self.D_pad - embed_dim)))
        self.w_img_bf16 = w.astype(jnp.bfloat16)

        # Text features depend only on the fixed label set -> encode,
        # L2-normalize, fold in the constant temperature, and pad ONCE here
        # (hoisted out of forward).
        with jax.default_matmul_precision("highest"):
            emb = jnp.take(self.tok_embed, self.tokenized_labels, axis=0)  # [L,T,E]
            tf = jnp.mean(emb, axis=1) @ self.w_txt                        # [L,D]
        tf = tf / jnp.linalg.norm(tf, axis=-1, keepdims=True)
        temperature = jnp.minimum(jnp.exp(self.logit_scale[0]),
                                  jnp.float32(100.0))
        tf = temperature * tf
        self.text_features_scaled = jnp.pad(
            tf, ((0, self.L_pad - num_labels), (0, self.D_pad - embed_dim)))

        # Additive label mask: 0 for real labels, -1e30 for padded columns.
        self.label_bias = jnp.where(
            jnp.arange(self.L_pad) < num_labels, 0.0, -1e30
        ).astype(jnp.float32)[None, :]

    def _pick_tm(self, batch):
        # Small batch: one sublane-aligned m block — W-DMA-bound regime, and
        # splitting m would just duplicate the W_img HBM stream.
        if batch <= 128:
            tm = _round_up(batch, 8)
            return tm, tm
        # Large batch: bigger tm stops re-streaming W_img per batch tile, but
        # keep >= 2 m-blocks so the "parallel" axis can use both v7x cores.
        tm = 512
        while tm > 128:
            if (_round_up(batch, tm) // tm >= 2 and
                    _vmem_estimate_bytes(tm, self.tk, self.D_pad,
                                         self.L_pad) <= _VMEM_BUDGET):
                break
            tm //= 2
        return tm, _round_up(batch, tm)

    @functools.partial(jax.jit, static_argnums=0)
    def forward(self, image_nchw):
        B = image_nchw.shape[0]
        x = image_nchw.reshape(B, -1).astype(jnp.float32)        # [B, K]
        tm, B_pad = self._pick_tm(B)
        pad_rows = B_pad - B
        pad_cols = self.K_pad - self.K
        if pad_rows or pad_cols:
            x = jnp.pad(x, ((0, pad_rows), (0, pad_cols)))
        x = x.astype(jnp.bfloat16)                               # bf16 stream
        probs = fused_clip_forward(
            x, self.w_img_bf16, self.text_features_scaled, self.label_bias,
            tm=tm, tk=self.tk)                                   # [B_pad, L_pad]
        return probs[:B, :self.num_labels]


# ---------------------------------------------------------------------------
# Main
# ---------------------------------------------------------------------------

if __name__ == "__main__":
    key = jax.random.PRNGKey(0)
    k_model, k_img = jax.random.split(key)

    B, C, H, W = 4, 3, 16, 16
    D = 128          # shared embedding dim (lane-friendly)
    NUM_LABELS = 8

    model = CLIPClassifierPallas(k_model, img_chw=(C, H, W),
                                 embed_dim=D, num_labels=NUM_LABELS)

    image = jax.random.normal(k_img, (B, C, H, W), jnp.float32)

    probs = jax.block_until_ready(model.forward(image))

    # Pure-JAX references.  bf16_image_matmul=True mirrors the kernel's bf16
    # operand cast (f32 accumulation); False is the original full-f32 module
    # semantics (checked at a relaxed tolerance).
    def ref_forward(image, bf16_image_matmul):
        with jax.default_matmul_precision("highest"):
            emb = jnp.take(model.tok_embed, model.tokenized_labels, axis=0)
            tf = jnp.mean(emb, axis=1) @ model.w_txt
            tf = tf / jnp.linalg.norm(tf, axis=-1, keepdims=True)
            x = image.reshape(image.shape[0], -1).astype(jnp.float32)
            w = model.w_img
            if bf16_image_matmul:
                x = x.astype(jnp.bfloat16).astype(jnp.float32)
                w = w.astype(jnp.bfloat16).astype(jnp.float32)
            imf = x @ w
            imf = imf / jnp.linalg.norm(imf, axis=-1, keepdims=True)
            temp = jnp.minimum(jnp.exp(model.logit_scale[0]), 100.0)
            logits = temp * (imf @ tf.T)
            return jax.nn.softmax(logits, axis=-1)

    ref_bf16 = ref_forward(image, True)    # same numerics path as the kernel
    ref_f32 = ref_forward(image, False)    # original f32 module semantics

    assert probs.shape == (B, NUM_LABELS)
    assert jnp.allclose(jnp.sum(probs, axis=-1), 1.0, atol=1e-5), (
        f"row sums {jnp.sum(probs, axis=-1)}")
    assert jnp.allclose(probs, ref_bf16, atol=5e-3, rtol=5e-3), (
        f"max abs err vs bf16 ref {jnp.max(jnp.abs(probs - ref_bf16))}")
    assert jnp.allclose(probs, ref_f32, atol=5e-2, rtol=5e-2), (
        f"max abs err vs f32 ref {jnp.max(jnp.abs(probs - ref_f32))}")

    print("KERNEL_OK")
</pallas_src>

<mosaic_0001>
module attributes {stable_mosaic.version = 11 : i64} {
  func.func @_fused_clip_kernel(%arg0: i32, %arg1: i32, %arg2: memref<8x768xbf16, #tpu.memory_space<vmem>>, %arg3: memref<768x128xbf16, #tpu.memory_space<vmem>>, %arg4: memref<128x128xf32, #tpu.memory_space<vmem>>, %arg5: memref<1x128xf32, #tpu.memory_space<vmem>>, %arg6: memref<8x128xf32, #tpu.memory_space<vmem>>, %arg7: memref<8x128xf32, #tpu.memory_space<vmem>>) attributes {dimension_semantics = [#tpu.dimension_semantics<parallel>, #tpu.dimension_semantics<arbitrary>], iteration_bounds = array<i64: 1, 1>, scalar_prefetch = 0 : i64, scratch_operands = 1 : i64, tpu.core_type = #tpu.core_type<tc>, window_params = [{transform_indices = @transform_0, window_bounds = array<i64: 8, 768>}, {transform_indices = @transform_1, window_bounds = array<i64: 768, 128>}, {pipeline_mode = #tpu.pipeline_mode<synchronous>, transform_indices = @transform_2, window_bounds = array<i64: 128, 128>}, {pipeline_mode = #tpu.pipeline_mode<synchronous>, transform_indices = @transform_3, window_bounds = array<i64: 1, 128>}, {transform_indices = @transform_4, window_bounds = array<i64: 8, 128>}]} {
    %c0_i32 = arith.constant 0 : i32
    %0 = arith.cmpi eq, %arg1, %c0_i32 : i32
    %1 = arith.extui %0 : i1 to i32
    %c0_i32_0 = arith.constant 0 : i32
    %2 = arith.cmpi ne, %1, %c0_i32_0 : i32
    scf.if %2 {
      %cst_10 = arith.constant 0.000000e+00 : f32
      %12 = vector.broadcast %cst_10 : f32 to vector<8x128xf32>
      %c0_11 = arith.constant 0 : index
      %c0_12 = arith.constant 0 : index
      %13 = vector.load %arg7[%c0_11, %c0_12] : memref<8x128xf32, #tpu.memory_space<vmem>>, vector<8x128xf32>
      tpu.vector_store %arg7[%c0_11, %c0_12], %12 {strides = array<i32>} : memref<8x128xf32, #tpu.memory_space<vmem>>, vector<8x128xf32>,
    } else {
    }
    %c0 = arith.constant 0 : index
    %c0_1 = arith.constant 0 : index
    %3 = vector.load %arg7[%c0, %c0_1] : memref<8x128xf32, #tpu.memory_space<vmem>>, vector<8x128xf32>
    %c0_2 = arith.constant 0 : index
    %c0_3 = arith.constant 0 : index
    %4 = vector.load %arg2[%c0_2, %c0_3] : memref<8x768xbf16, #tpu.memory_space<vmem>>, vector<8x768xbf16>
    %c0_4 = arith.constant 0 : index
    %c0_5 = arith.constant 0 : index
    %5 = vector.load %arg3[%c0_4, %c0_5] : memref<768x128xbf16, #tpu.memory_space<vmem>>, vector<768x128xbf16>
    %cst = arith.constant dense<0.000000e+00> : vector<8x128xf32>
    %6 = tpu.matmul %4, %5, %cst {dimension_numbers = #tpu.dot_dimension_numbers<[1], [0], [0], [1], [0, 0, 1, 1], [], []>} : vector<8x768xbf16>, vector<768x128xbf16>, vector<8x128xf32> -> vector<8x128xf32>
    %7 = arith.addf %3, %6 : vector<8x128xf32>
    %c0_6 = arith.constant 0 : index
    %c0_7 = arith.constant 0 : index
    %8 = vector.load %arg7[%c0_6, %c0_7] : memref<8x128xf32, #tpu.memory_space<vmem>>, vector<8x128xf32>
    tpu.vector_store %arg7[%c0_6, %c0_7], %7 {strides = array<i32>} : memref<8x128xf32, #tpu.memory_space<vmem>>, vector<8x128xf32>,
    %c0_i32_8 = arith.constant 0 : i32
    %9 = arith.cmpi eq, %arg1, %c0_i32_8 : i32
    %10 = arith.extui %9 : i1 to i32
    %c0_i32_9 = arith.constant 0 : i32
    %11 = arith.cmpi ne, %10, %c0_i32_9 : i32
    scf.if %11 {
      %c0_10 = arith.constant 0 : index
      %c0_11 = arith.constant 0 : index
      %12 = vector.load %arg7[%c0_10, %c0_11] : memref<8x128xf32, #tpu.memory_space<vmem>>, vector<8x128xf32>
      %13 = arith.mulf %12, %12 : vector<8x128xf32>
      %cst_12 = arith.constant dense<0.000000e+00> : vector<8xf32>
      %14 = vector.multi_reduction <add>, %13, %cst_12 [1] : vector<8x128xf32> to vector<8xf32>
      %15 = vector.shape_cast %14 : vector<8xf32> to vector<8x1xf32>
      %cst_13 = arith.constant 9.99999996E-13 : f32
      %16 = vector.broadcast %cst_13 : f32 to vector<8x1xf32>
      %17 = arith.addf %15, %16 : vector<8x1xf32>
      %18 = math.rsqrt %17 : vector<8x1xf32>
      %19 = vector.broadcast %18 : vector<8x1xf32> to vector<8x128xf32>
      %20 = arith.mulf %12, %19 : vector<8x128xf32>
      %c0_14 = arith.constant 0 : index
      %c0_15 = arith.constant 0 : index
      %21 = vector.load %arg4[%c0_14, %c0_15] : memref<128x128xf32, #tpu.memory_space<vmem>>, vector<128x128xf32>
      %cst_16 = arith.constant dense<0.000000e+00> : vector<8x128xf32>
      %22 = tpu.matmul %20, %21, %cst_16 {dimension_numbers = #tpu.dot_dimension_numbers<[1], [1], [0], [0], [0, 0, 1, 0], [], []>} : vector<8x128xf32>, vector<128x128xf32>, vector<8x128xf32> -> vector<8x128xf32>
      %c0_17 = arith.constant 0 : index
      %c0_18 = arith.constant 0 : index
      %23 = vector.load %arg5[%c0_17, %c0_18] : memref<1x128xf32, #tpu.memory_space<vmem>>, vector<1x128xf32>
      %24 = vector.broadcast %23 : vector<1x128xf32> to vector<8x128xf32>
      %25 = arith.addf %22, %24 : vector<8x128xf32>
      %cst_19 = arith.constant dense<0xFF800000> : vector<8xf32>
      %26 = vector.multi_reduction <maximumf>, %25, %cst_19 [1] : vector<8x128xf32> to vector<8xf32>
      %27 = vector.shape_cast %26 : vector<8xf32> to vector<8x1xf32>
      %28 = vector.broadcast %27 : vector<8x1xf32> to vector<8x128xf32>
      %29 = arith.subf %25, %28 : vector<8x128xf32>
      %30 = math.exp %29 : vector<8x128xf32>
      %cst_20 = arith.constant dense<0.000000e+00> : vector<8xf32>
      %31 = vector.multi_reduction <add>, %30, %cst_20 [1] : vector<8x128xf32> to vector<8xf32>
      %32 = vector.shape_cast %31 : vector<8xf32> to vector<8x1xf32>
      %33 = tpu.reciprocal %32 : vector<8x1xf32> -> vector<8x1xf32>
      %34 = vector.broadcast %33 : vector<8x1xf32> to vector<8x128xf32>
      %35 = arith.mulf %30, %34 : vector<8x128xf32>
      %c0_21 = arith.constant 0 : index
      %c0_22 = arith.constant 0 : index
      %36 = vector.load %arg6[%c0_21, %c0_22] : memref<8x128xf32, #tpu.memory_space<vmem>>, vector<8x128xf32>
      tpu.vector_store %arg6[%c0_21, %c0_22], %35 {strides = array<i32>} : memref<8x128xf32, #tpu.memory_space<vmem>>, vector<8x128xf32>,
    } else {
    }
    return
  }
  func.func @transform_0(%arg0: i32, %arg1: i32) -> (i32, i32) {
    %c0_i32 = arith.constant 0 : i32
    return %arg0, %arg1 : i32, i32
  }
  func.func @transform_1(%arg0: i32, %arg1: i32) -> (i32, i32) {
    %c0_i32 = arith.constant 0 : i32
    %c0_i32_0 = arith.constant 0 : i32
    return %arg1, %c0_i32 : i32, i32
  }
  func.func @transform_2(%arg0: i32, %arg1: i32) -> (i32, i32) {
    %c0_i32 = arith.constant 0 : i32
    %c0_i32_0 = arith.constant 0 : i32
    %c0_i32_1 = arith.constant 0 : i32
    return %c0_i32, %c0_i32_0 : i32, i32
  }
  func.func @transform_3(%arg0: i32, %arg1: i32) -> (i32, i32) {
    %c0_i32 = arith.constant 0 : i32
    %c0_i32_0 = arith.constant 0 : i32
    %c0_i32_1 = arith.constant 0 : i32
    return %c0_i32, %c0_i32_0 : i32, i32
  }
  func.func @transform_4(%arg0: i32, %arg1: i32) -> (i32, i32) {
    %c0_i32 = arith.constant 0 : i32
    %c0_i32_0 = arith.constant 0 : i32
    return %arg0, %c0_i32 : i32, i32
  }
}

</mosaic_0001>

<llo_original>
// kernel: forward.1
$region0: #{forward.1}
  #allocation0 [shape = 'u32[]', space=smem, size = 0x4, offset = 0x4, fixed_abs, tag = 'smem constant byte address 0x4 - core index']
  #allocation1 [shape = 'u32[144,128]{1,0:T(1,128)}', space=vmem, size = 0x12000, scoped, tag = 'internal scratch']
  #allocation2 [shape = 'f32[8,128]{1,0:T(8,128)}', space=vmem, size = 0x1000, scoped, tag = 'scratch operand']
  %s0 = inlined_call_operand.vmem [shape: bf16[8,768], index: 0, kind: input, shape index: {}]
  %s1 = inlined_call_operand.vmem [shape: bf16[768,128], index: 1, kind: input, shape index: {}]
  %s2 = inlined_call_operand.hbm [shape: f32[128,128], index: 2, kind: input, shape index: {}]
  %s3 = inlined_call_operand.vmem [shape: f32[1,128], index: 3, kind: input, shape index: {}]
  %s4 = inlined_call_operand.vmem [shape: f32[8,128], index: 4, kind: output, shape index: {}]
  %s5 = sld [smem:[#allocation0]]
  $region38: #{forward.1} parent=0
    _
  %s7 = ssub.s32 1, %s5
  %s8 = scalar_select 0, %s7, %s5
  $region1: #{forward.1} parent=0
    #allocation3 [shape = 'u8[65536]{0}', space=vmem, size = 0x10000, scoped, tag = 'input window, operand 2, single buffered']
    #allocation4 [shape = 's32[1]{0}', space=sflag, size = 0x4, scoped, tag = 'scoped memory for forward.1']
    %9 = vsyncpa [#allocation4], 0
    // Predicated region
    $region2: #{forward.1} parent=1 // pred_check
      _
    $region3: #{forward.1} parent=1 // pred_check_branch
      %11 = sbr.rel (0) target = $region5
    $region4: #{forward.1} parent=1 // pred_region
      _
    $region5: #{forward.1} parent=1 // pred_fallthru
      _
    // Predicated region
    $region6: #{forward.1} parent=1 // pred_check
      _
    $region7: #{forward.1} parent=1 // pred_check_branch
      %13 = sbr.rel (0) target = $region9
    $region8: #{forward.1} parent=1 // pred_region
      _
    $region9: #{forward.1} parent=1 // pred_fallthru
      _
    // Predicated region
    $region10: #{forward.1} parent=1 // pred_check
      _
    $region11: #{forward.1} parent=1 // pred_check_branch
      %15 = sbr.rel (0) target = $region13
    $region12: #{forward.1} parent=1 // pred_region
      %s17 = ssub.s32 2048, 2048
      %18 = vsyncadd [#allocation4], %s17
      %s19 = sshll.u32 [#allocation3], 4
      %s20 = int_to_ptr.vmem [resolvable:$true] %s19
      %25 = dma.hbm_to_vmem [thread:$0]  %s2, 2048, %s20, [#allocation4], 128, 128, 8
    $region13: #{forward.1} parent=1 // pred_fallthru
      _
    // Predicated region
    $region14: #{forward.1} parent=1 // pred_check
      _
    $region15: #{forward.1} parent=1 // pred_check_branch
      %27 = sbr.rel (0) target = $region17
    $region16: #{forward.1} parent=1 // pred_region
      _
    $region17: #{forward.1} parent=1 // pred_fallthru
      _
    // Predicated region
    $region18: #{forward.1} parent=1 // pred_check
      _
    $region19: #{forward.1} parent=1 // pred_check_branch
      %29 = sbr.rel (0) target = $region21
    $region20: #{forward.1} parent=1 // pred_region
      %30 = dma.done [#allocation4], 2048
    $region21: #{forward.1} parent=1 // pred_fallthru
      _
    %p32 = scmp.eq.s32.totalorder 0, 0
    // Predicated region
    $region22: #{forward.1} parent=1 // pred_check
      %p33 = pneg %p32
    $region23: #{forward.1} parent=1 // pred_check_branch
      %35 = sbr.rel (%p33) target = $region25
    $region24: #{forward.1} parent=1 // pred_region
      %36 = vst [vmem:[#allocation2] sm:$0xff] 0.0
    $region25: #{forward.1} parent=1 // pred_fallthru
      _
    %v37 = vld [vmem:[#allocation2] sm:$0xff]
    %v38 = vld [vmem:[%s0] sm:$0xff]
    %v39 = vld [vmem:[%s0 + $0x8] sm:$0xff]
    %v40 = vld [vmem:[%s0 + $0x10] sm:$0xff]
    %v41 = vld [vmem:[%s1] sm:$0xf]
    %v42 = vld [vmem:[%s1 + $0x4] sm:$0xf]
    %v43 = vld [vmem:[%s1 + $0x8] sm:$0xf]
    %v44 = vld [vmem:[%s1 + $0xc] sm:$0xf]
    %v45 = vld [vmem:[%s1 + $0x10] sm:$0xf]
    %v46 = vld [vmem:[%s1 + $0x14] sm:$0xf]
    %v47 = vld [vmem:[%s1 + $0x18] sm:$0xf]
    %v48 = vld [vmem:[%s1 + $0x1c] sm:$0xf]
    %v49 = vld [vmem:[%s1 + $0x20] sm:$0xf]
    %v50 = vld [vmem:[%s1 + $0x24] sm:$0xf]
    %v51 = vld [vmem:[%s1 + $0x28] sm:$0xf]
    %v52 = vld [vmem:[%s1 + $0x2c] sm:$0xf]
    %v53 = vld [vmem:[%s1 + $0x30] sm:$0xf]
    %v54 = vld [vmem:[%s1 + $0x34] sm:$0xf]
    %v55 = vld [vmem:[%s1 + $0x38] sm:$0xf]
    %v56 = vld [vmem:[%s1 + $0x3c] sm:$0xf]
    %v57 = vld [vmem:[%s1 + $0x40] sm:$0xf]
    %v58 = vld [vmem:[%s1 + $0x44] sm:$0xf]
    %v59 = vld [vmem:[%s1 + $0x48] sm:$0xf]
    %v60 = vld [vmem:[%s1 + $0x4c] sm:$0xf]
    %v61 = vld [vmem:[%s1 + $0x50] sm:$0xf]
    %v62 = vld [vmem:[%s1 + $0x54] sm:$0xf]
    %v63 = vld [vmem:[%s1 + $0x58] sm:$0xf]
    %v64 = vld [vmem:[%s1 + $0x5c] sm:$0xf]
    %v65 = vld [vmem:[%s1 + $0x60] sm:$0xf]
    %v66 = vld [vmem:[%s1 + $0x64] sm:$0xf]
    %v67 = vld [vmem:[%s1 + $0x68] sm:$0xf]
    %v68 = vld [vmem:[%s1 + $0x6c] sm:$0xf]
    %v69 = vld [vmem:[%s1 + $0x70] sm:$0xf]
    %v70 = vld [vmem:[%s1 + $0x74] sm:$0xf]
    %v71 = vld [vmem:[%s1 + $0x78] sm:$0xf]
    %v72 = vld [vmem:[%s1 + $0x7c] sm:$0xf]
    %v73 = vld [vmem:[%s1 + $0x80] sm:$0xf]
    %v74 = vld [vmem:[%s1 + $0x84] sm:$0xf]
    %v75 = vld [vmem:[%s1 + $0x88] sm:$0xf]
    %v76 = vld [vmem:[%s1 + $0x8c] sm:$0xf]
    %v77 = vld [vmem:[%s1 + $0x90] sm:$0xf]
    %v78 = vld [vmem:[%s1 + $0x94] sm:$0xf]
    %v79 = vld [vmem:[%s1 + $0x98] sm:$0xf]
    %v80 = vld [vmem:[%s1 + $0x9c] sm:$0xf]
    %v81 = vld [vmem:[%s1 + $0xa0] sm:$0xf]
    %v82 = vld [vmem:[%s1 + $0xa4] sm:$0xf]
    %v83 = vld [vmem:[%s1 + $0xa8] sm:$0xf]
    %v84 = vld [vmem:[%s1 + $0xac] sm:$0xf]
    %v85 = vld [vmem:[%s1 + $0xb0] sm:$0xf]
    %v86 = vld [vmem:[%s1 + $0xb4] sm:$0xf]
    %v87 = vld [vmem:[%s1 + $0xb8] sm:$0xf]
    %v88 = vld [vmem:[%s1 + $0xbc] sm:$0xf]
    %v89 = vld [vmem:[%s1 + $0xc0] sm:$0xf]
    %v90 = vld [vmem:[%s1 + $0xc4] sm:$0xf]
    %v91 = vld [vmem:[%s1 + $0xc8] sm:$0xf]
    %v92 = vld [vmem:[%s1 + $0xcc] sm:$0xf]
    %v93 = vld [vmem:[%s1 + $0xd0] sm:$0xf]
    %v94 = vld [vmem:[%s1 + $0xd4] sm:$0xf]
    %v95 = vld [vmem:[%s1 + $0xd8] sm:$0xf]
    %v96 = vld [vmem:[%s1 + $0xdc] sm:$0xf]
    %v97 = vld [vmem:[%s1 + $0xe0] sm:$0xf]
    %v98 = vld [vmem:[%s1 + $0xe4] sm:$0xf]
    %v99 = vld [vmem:[%s1 + $0xe8] sm:$0xf]
    %v100 = vld [vmem:[%s1 + $0xec] sm:$0xf]
    %v101 = vld [vmem:[%s1 + $0xf0] sm:$0xf]
    %v102 = vld [vmem:[%s1 + $0xf4] sm:$0xf]
    %v103 = vld [vmem:[%s1 + $0xf8] sm:$0xf]
    %v104 = vld [vmem:[%s1 + $0xfc] sm:$0xf]
    %v105 = vld [vmem:[%s1 + $0x100] sm:$0xf]
    %v106 = vld [vmem:[%s1 + $0x104] sm:$0xf]
    %v107 = vld [vmem:[%s1 + $0x108] sm:$0xf]
    %v108 = vld [vmem:[%s1 + $0x10c] sm:$0xf]
    %v109 = vld [vmem:[%s1 + $0x110] sm:$0xf]
    %v110 = vld [vmem:[%s1 + $0x114] sm:$0xf]
    %v111 = vld [vmem:[%s1 + $0x118] sm:$0xf]
    %v112 = vld [vmem:[%s1 + $0x11c] sm:$0xf]
    %v113 = vld [vmem:[%s1 + $0x120] sm:$0xf]
    %v114 = vld [vmem:[%s1 + $0x124] sm:$0xf]
    %v115 = vld [vmem:[%s1 + $0x128] sm:$0xf]
    %v116 = vld [vmem:[%s1 + $0x12c] sm:$0xf]
    %v117 = vld [vmem:[%s1 + $0x130] sm:$0xf]
    %v118 = vld [vmem:[%s1 + $0x134] sm:$0xf]
    %v119 = vld [vmem:[%s1 + $0x138] sm:$0xf]
    %v120 = vld [vmem:[%s1 + $0x13c] sm:$0xf]
    %v121 = vld [vmem:[%s1 + $0x140] sm:$0xf]
    %v122 = vld [vmem:[%s1 + $0x144] sm:$0xf]
    %v123 = vld [vmem:[%s1 + $0x148] sm:$0xf]
    %v124 = vld [vmem:[%s1 + $0x14c] sm:$0xf]
    %v125 = vld [vmem:[%s1 + $0x150] sm:$0xf]
    %v126 = vld [vmem:[%s1 + $0x154] sm:$0xf]
    %v127 = vld [vmem:[%s1 + $0x158] sm:$0xf]
    %v128 = vld [vmem:[%s1 + $0x15c] sm:$0xf]
    %v129 = vld [vmem:[%s1 + $0x160] sm:$0xf]
    %v130 = vld [vmem:[%s1 + $0x164] sm:$0xf]
    %v131 = vld [vmem:[%s1 + $0x168] sm:$0xf]
    %v132 = vld [vmem:[%s1 + $0x16c] sm:$0xf]
    %v133 = vld [vmem:[%s1 + $0x170] sm:$0xf]
    %v134 = vld [vmem:[%s1 + $0x174] sm:$0xf]
    %v135 = vld [vmem:[%s1 + $0x178] sm:$0xf]
    %v136 = vld [vmem:[%s1 + $0x17c] sm:$0xf]
    %v140 = vunpack.c.l.b16 %v38
    %v141 = vunpack.c.h.b16 %v38
    %v142 = vunpack.c.l.b16 %v39
    %v143 = vunpack.c.h.b16 %v39
    %v144 = vunpack.c.l.b16 %v40
    %v145 = vunpack.c.h.b16 %v40
    %v146 = vpack.c.b16 %v140, %v140
    %v147 = vpack.c.b16 %v141, %v141
    %v148 = vpack.c.b16 %v142, %v142
    %v149 = vpack.c.b16 %v143, %v143
    %v150 = vpack.c.b16 %v144, %v144
    %v151 = vpack.c.b16 %v145, %v145
    %v254 = vunpack.c.l.b16 %v41
    %v255 = vunpack.c.l.b16 %v42
    %v256 = vunpack.c.l.b16 %v43
    %v257 = vunpack.c.l.b16 %v44
    %v258 = vunpack.c.l.b16 %v45
    %v259 = vunpack.c.l.b16 %v46
    %v260 = vunpack.c.l.b16 %v47
    %v261 = vunpack.c.l.b16 %v48
    %v262 = vunpack.c.l.b16 %v49
    %v263 = vunpack.c.l.b16 %v50
    %v264 = vunpack.c.l.b16 %v51
    %v265 = vunpack.c.l.b16 %v52
    %v266 = vunpack.c.l.b16 %v53
    %v267 = vunpack.c.l.b16 %v54
    %v268 = vunpack.c.l.b16 %v55
    %v269 = vunpack.c.l.b16 %v56
    %v270 = vunpack.c.l.b16 %v57
    %v271 = vunpack.c.l.b16 %v58
    %v272 = vunpack.c.l.b16 %v59
    %v273 = vunpack.c.l.b16 %v60
    %v274 = vunpack.c.l.b16 %v61
    %v275 = vunpack.c.l.b16 %v62
    %v276 = vunpack.c.l.b16 %v63
    %v277 = vunpack.c.l.b16 %v64
    %v278 = vunpack.c.l.b16 %v65
    %v279 = vunpack.c.l.b16 %v66
    %v280 = vunpack.c.l.b16 %v67
    %v281 = vunpack.c.l.b16 %v68
    %v282 = vunpack.c.l.b16 %v69
    %v283 = vunpack.c.l.b16 %v70
    %v284 = vunpack.c.l.b16 %v71
    %v285 = vunpack.c.l.b16 %v72
    %v286 = vunpack.c.l.b16 %v73
    %v287 = vunpack.c.l.b16 %v74
    %v288 = vunpack.c.l.b16 %v75
    %v289 = vunpack.c.l.b16 %v76
    %v290 = vunpack.c.l.b16 %v77
    %v291 = vunpack.c.l.b16 %v78
    %v292 = vunpack.c.l.b16 %v79
    %v293 = vunpack.c.l.b16 %v80
    %v294 = vunpack.c.l.b16 %v81
    %v295 = vunpack.c.l.b16 %v82
    %v296 = vunpack.c.l.b16 %v83
    %v297 = vunpack.c.l.b16 %v84
    %v298 = vunpack.c.l.b16 %v85
    %v299 = vunpack.c.l.b16 %v86
    %v300 = vunpack.c.l.b16 %v87
    %v301 = vunpack.c.l.b16 %v88
    %v302 = vunpack.c.l.b16 %v89
    %v303 = vunpack.c.l.b16 %v90
    %v304 = vunpack.c.l.b16 %v91
    %v305 = vunpack.c.l.b16 %v92
    %v306 = vunpack.c.l.b16 %v93
    %v307 = vunpack.c.l.b16 %v94
    %v308 = vunpack.c.l.b16 %v95
    %v309 = vunpack.c.l.b16 %v96
    %v310 = vunpack.c.l.b16 %v97
    %v311 = vunpack.c.l.b16 %v98
    %v312 = vunpack.c.l.b16 %v99
    %v313 = vunpack.c.l.b16 %v100
    %v314 = vunpack.c.l.b16 %v101
    %v315 = vunpack.c.l.b16 %v102
    %v316 = vunpack.c.l.b16 %v103
    %v317 = vunpack.c.l.b16 %v104
    %v318 = vunpack.c.l.b16 %v105
    %v319 = vunpack.c.l.b16 %v106
    %v320 = vunpack.c.l.b16 %v107
    %v321 = vunpack.c.l.b16 %v108
    %v322 = vunpack.c.l.b16 %v109
    %v323 = vunpack.c.l.b16 %v110
    %v324 = vunpack.c.l.b16 %v111
    %v325 = vunpack.c.l.b16 %v112
    %v326 = vunpack.c.l.b16 %v113
    %v327 = vunpack.c.l.b16 %v114
    %v328 = vunpack.c.l.b16 %v115
    %v329 = vunpack.c.l.b16 %v116
    %v330 = vunpack.c.l.b16 %v117
    %v331 = vunpack.c.l.b16 %v118
    %v332 = vunpack.c.l.b16 %v119
    %v333 = vunpack.c.l.b16 %v120
    %v334 = vunpack.c.l.b16 %v121
    %v335 = vunpack.c.l.b16 %v122
    %v336 = vunpack.c.l.b16 %v123
    %v337 = vunpack.c.l.b16 %v124
    %v338 = vunpack.c.l.b16 %v125
    %v339 = vunpack.c.l.b16 %v126
    %v340 = vunpack.c.l.b16 %v127
    %v341 = vunpack.c.l.b16 %v128
    %v342 = vunpack.c.l.b16 %v129
    %v343 = vunpack.c.l.b16 %v130
    %v344 = vunpack.c.l.b16 %v131
    %v345 = vunpack.c.l.b16 %v132
    %v346 = vunpack.c.l.b16 %v133
    %v347 = vunpack.c.l.b16 %v134
    %v348 = vunpack.c.l.b16 %v135
    %v349 = vunpack.c.l.b16 %v136
    %v350 = vpack.c.b16 %v255, %v254
    %v351 = vpack.c.b16 %v257, %v256
    %v352 = vpack.c.b16 %v259, %v258
    %v353 = vpack.c.b16 %v261, %v260
    %v354 = vpack.c.b16 %v263, %v262
    %v355 = vpack.c.b16 %v265, %v264
    %v356 = vpack.c.b16 %v267, %v266
    %v357 = vpack.c.b16 %v269, %v268
    %v358 = vpack.c.b16 %v271, %v270
    %v359 = vpack.c.b16 %v273, %v272
    %v360 = vpack.c.b16 %v275, %v274
    %v361 = vpack.c.b16 %v277, %v276
    %v362 = vpack.c.b16 %v279, %v278
    %v363 = vpack.c.b16 %v281, %v280
    %v364 = vpack.c.b16 %v283, %v282
    %v365 = vpack.c.b16 %v285, %v284
    %v366 = vpack.c.b16 %v287, %v286
    %v367 = vpack.c.b16 %v289, %v288
    %v368 = vpack.c.b16 %v291, %v290
    %v369 = vpack.c.b16 %v293, %v292
    %v370 = vpack.c.b16 %v295, %v294
    %v371 = vpack.c.b16 %v297, %v296
    %v372 = vpack.c.b16 %v299, %v298
    %v373 = vpack.c.b16 %v301, %v300
    %v374 = vpack.c.b16 %v303, %v302
    %v375 = vpack.c.b16 %v305, %v304
    %v376 = vpack.c.b16 %v307, %v306
    %v377 = vpack.c.b16 %v309, %v308
    %v378 = vpack.c.b16 %v311, %v310
    %v379 = vpack.c.b16 %v313, %v312
    %v380 = vpack.c.b16 %v315, %v314
    %v381 = vpack.c.b16 %v317, %v316
    %v382 = vpack.c.b16 %v319, %v318
    %v383 = vpack.c.b16 %v321, %v320
    %v384 = vpack.c.b16 %v323, %v322
    %v385 = vpack.c.b16 %v325, %v324
    %v386 = vpack.c.b16 %v327, %v326
    %v387 = vpack.c.b16 %v329, %v328
    %v388 = vpack.c.b16 %v331, %v330
    %v389 = vpack.c.b16 %v333, %v332
    %v390 = vpack.c.b16 %v335, %v334
    %v391 = vpack.c.b16 %v337, %v336
    %v392 = vpack.c.b16 %v339, %v338
    %v393 = vpack.c.b16 %v341, %v340
    %v394 = vpack.c.b16 %v343, %v342
    %v395 = vpack.c.b16 %v345, %v344
    %v396 = vpack.c.b16 %v347, %v346
    %v397 = vpack.c.b16 %v349, %v348
    %446 = vmatprep.subr.bf16.mxu0 0
    %447 = vmatpush1.bf16.msra.mxu0 %v350
    %448 = vmatprep.subr.bf16.mxu0 0
    %449 = vmatpush1.bf16.msra.mxu0 %v351
    %450 = vmatprep.subr.bf16.mxu0 0
    %451 = vmatpush1.bf16.msra.mxu0 %v352
    %452 = vmatprep.subr.bf16.mxu0 0
    %453 = vmatpush1.bf16.msra.mxu0 %v353
    %454 = vmatprep.subr.bf16.mxu0 0
    %455 = vmatpush1.bf16.msra.mxu0 %v354
    %456 = vmatprep.subr.bf16.mxu0 0
    %457 = vmatpush1.bf16.msra.mxu0 %v355
    %458 = vmatprep.subr.bf16.mxu0 0
    %459 = vmatpush1.bf16.msra.mxu0 %v356
    %460 = vmatprep.subr.bf16.mxu0 0
    %461 = vmatpush1.bf16.msra.mxu0 %v357
    %462 = vmatprep.subr.bf16.mxu0 0
    %463 = vmatpush1.bf16.msra.mxu0 %v358
    %464 = vmatprep.subr.bf16.mxu0 0
    %465 = vmatpush1.bf16.msra.mxu0 %v359
    %466 = vmatprep.subr.bf16.mxu0 0
    %467 = vmatpush1.bf16.msra.mxu0 %v360
    %468 = vmatprep.subr.bf16.mxu0 0
    %469 = vmatpush1.bf16.msra.mxu0 %v361
    %470 = vmatprep.subr.bf16.mxu0 0
    %471 = vmatpush1.bf16.msra.mxu0 %v362
    %472 = vmatprep.subr.bf16.mxu0 0
    %473 = vmatpush1.bf16.msra.mxu0 %v363
    %474 = vmatprep.subr.bf16.mxu0 0
    %475 = vmatpush1.bf16.msra.mxu0 %v364
    %476 = vmatprep.subr.bf16.mxu0 0
    %477 = vmatpush1.bf16.msra.mxu0 %v365
    %478 = vmatprep.mubr.bf16.mxu0 %v147
    %479 = vmatmul.mubr.bf16.gmra.mrb[0].mxu0 %v146
    %v480 = vpop.f32.mrb[0].mxu0
    %v481 = vadd.f32 0.0, %v480
    %v482 = vpop.f32.mrb[0].mxu0
    %v483 = vpop.f32.mrb[0].mxu0
    %v484 = vpop.f32.mrb[0].mxu0
    %485 = vdwg.mxu0
    %486 = vmatprep.subr.bf16.mxu0 0
    %487 = vmatpush1.bf16.msra.mxu0 %v366
    %488 = vmatprep.subr.bf16.mxu0 0
    %489 = vmatpush1.bf16.msra.mxu0 %v367
    %490 = vmatprep.subr.bf16.mxu0 0
    %491 = vmatpush1.bf16.msra.mxu0 %v368
    %492 = vmatprep.subr.bf16.mxu0 0
    %493 = vmatpush1.bf16.msra.mxu0 %v369
    %494 = vmatprep.subr.bf16.mxu0 0
    %495 = vmatpush1.bf16.msra.mxu0 %v370
    %496 = vmatprep.subr.bf16.mxu0 0
    %497 = vmatpush1.bf16.msra.mxu0 %v371
    %498 = vmatprep.subr.bf16.mxu0 0
    %499 = vmatpush1.bf16.msra.mxu0 %v372
    %500 = vmatprep.subr.bf16.mxu0 0
    %501 = vmatpush1.bf16.msra.mxu0 %v373
    %502 = vmatprep.subr.bf16.mxu0 0
    %503 = vmatpush1.bf16.msra.mxu0 %v374
    %504 = vmatprep.subr.bf16.mxu0 0
    %505 = vmatpush1.bf16.msra.mxu0 %v375
    %506 = vmatprep.subr.bf16.mxu0 0
    %507 = vmatpush1.bf16.msra.mxu0 %v376
    %508 = vmatprep.subr.bf16.mxu0 0
    %509 = vmatpush1.bf16.msra.mxu0 %v377
    %510 = vmatprep.subr.bf16.mxu0 0
    %511 = vmatpush1.bf16.msra.mxu0 %v378
    %512 = vmatprep.subr.bf16.mxu0 0
    %513 = vmatpush1.bf16.msra.mxu0 %v379
    %514 = vmatprep.subr.bf16.mxu0 0
    %515 = vmatpush1.bf16.msra.mxu0 %v380
    %516 = vmatprep.subr.bf16.mxu0 0
    %517 = vmatpush1.bf16.msra.mxu0 %v381
    %518 = vmatprep.mubr.bf16.mxu0 %v149
    %519 = vmatmul.mubr.bf16.gmra.mrb[0].mxu0 %v148
    %v520 = vpop.f32.mrb[0].mxu0
    %v521 = vadd.f32 %v481, %v520
    %v522 = vpop.f32.mrb[0].mxu0
    %v523 = vpop.f32.mrb[0].mxu0
    %v524 = vpop.f32.mrb[0].mxu0
    %525 = vdwg.mxu0
    %526 = vmatprep.subr.bf16.mxu0 0
    %527 = vmatpush1.bf16.msra.mxu0 %v382
    %528 = vmatprep.subr.bf16.mxu0 0
    %529 = vmatpush1.bf16.msra.mxu0 %v383
    %530 = vmatprep.subr.bf16.mxu0 0
    %531 = vmatpush1.bf16.msra.mxu0 %v384
    %532 = vmatprep.subr.bf16.mxu0 0
    %533 = vmatpush1.bf16.msra.mxu0 %v385
    %534 = vmatprep.subr.bf16.mxu0 0
    %535 = vmatpush1.bf16.msra.mxu0 %v386
    %536 = vmatprep.subr.bf16.mxu0 0
    %537 = vmatpush1.bf16.msra.mxu0 %v387
    %538 = vmatprep.subr.bf16.mxu0 0
    %539 = vmatpush1.bf16.msra.mxu0 %v388
    %540 = vmatprep.subr.bf16.mxu0 0
    %541 = vmatpush1.bf16.msra.mxu0 %v389
    %542 = vmatprep.subr.bf16.mxu0 0
    %543 = vmatpush1.bf16.msra.mxu0 %v390
    %544 = vmatprep.subr.bf16.mxu0 0
    %545 = vmatpush1.bf16.msra.mxu0 %v391
    %546 = vmatprep.subr.bf16.mxu0 0
    %547 = vmatpush1.bf16.msra.mxu0 %v392
    %548 = vmatprep.subr.bf16.mxu0 0
    %549 = vmatpush1.bf16.msra.mxu0 %v393
    %550 = vmatprep.subr.bf16.mxu0 0
    %551 = vmatpush1.bf16.msra.mxu0 %v394
    %552 = vmatprep.subr.bf16.mxu0 0
    %553 = vmatpush1.bf16.msra.mxu0 %v395
    %554 = vmatprep.subr.bf16.mxu0 0
    %555 = vmatpush1.bf16.msra.mxu0 %v396
    %556 = vmatprep.subr.bf16.mxu0 0
    %557 = vmatpush1.bf16.msra.mxu0 %v397
    %558 = vmatprep.mubr.bf16.mxu0 %v151
    %559 = vmatmul.mubr.bf16.gmra.mrb[0].mxu0 %v150
    %v560 = vpop.f32.mrb[0].mxu0
    %v561 = vadd.f32 %v521, %v560
    %v562 = vpop.f32.mrb[0].mxu0
    %v563 = vpop.f32.mrb[0].mxu0
    %v564 = vpop.f32.mrb[0].mxu0
    %565 = vdwg.mxu0
    %v566 = vadd.f32 %v37, %v561
    %567 = vst [vmem:[#allocation2] sm:$0xff] %v566
    // Predicated region
    $region26: #{forward.1} parent=1 // pred_check
      %p568 = pneg %p32
    $region27: #{forward.1} parent=1 // pred_check_branch
      %570 = sbr.rel (%p568) target = $region29
    $region28: #{forward.1} parent=1 // pred_region
      %v571 = vld [vmem:[#allocation2] sm:$0xff]
      %v572 = vmul.f32 %v571, %v571
      %573 = vadd.xlane.f32.xlu0 %v572
      %v574 = vpop.xlane.xlu0 %573
      %v575 = vadd.f32 %v574, 1e-12
      %v576 = vrsqrt.pop %v575
      %v577 = vmul.f32 %v571, %v576
      %v578 = vld [vmem:[#allocation3] sm:$0xff]
      %v579 = vld [vmem:[#allocation3 + $0x8] sm:$0xff]
      %v580 = vld [vmem:[#allocation3 + $0x10] sm:$0xff]
      %v581 = vld [vmem:[#allocation3 + $0x18] sm:$0xff]
      %v582 = vld [vmem:[#allocation3 + $0x20] sm:$0xff]
      %v583 = vld [vmem:[#allocation3 + $0x28] sm:$0xff]
      %v584 = vld [vmem:[#allocation3 + $0x30] sm:$0xff]
      %v585 = vld [vmem:[#allocation3 + $0x38] sm:$0xff]
      %v586 = vld [vmem:[#allocation3 + $0x40] sm:$0xff]
      %v587 = vld [vmem:[#allocation3 + $0x48] sm:$0xff]
      %v588 = vld [vmem:[#allocation3 + $0x50] sm:$0xff]
      %v589 = vld [vmem:[#allocation3 + $0x58] sm:$0xff]
      %v590 = vld [vmem:[#allocation3 + $0x60] sm:$0xff]
      %v591 = vld [vmem:[#allocation3 + $0x68] sm:$0xff]
      %v592 = vld [vmem:[#allocation3 + $0x70] sm:$0xff]
      %v593 = vld [vmem:[#allocation3 + $0x78] sm:$0xff]
      %v594 = vld [vmem:[%s3] sm:$0x1]
      %v596 = vlaneseq
      %v597 = vshrl.u32 %v596, 7
      %v598 = vsub.s32 0, %v597
      %v599 = vrot.slane %v594, %v598
      %601 = vmatprep.subr.mxu0 0.0
      %602 = vmatpush1.xpose.msra.mxu0 %v578
      %603 = vmatprep.subr.mxu0 0.0
      %604 = vmatpush1.xpose.msra.mxu0 %v579
      %605 = vmatprep.subr.mxu0 0.0
      %606 = vmatpush1.xpose.msra.mxu0 %v580
      %607 = vmatprep.subr.mxu0 0.0
      %608 = vmatpush1.xpose.msra.mxu0 %v581
      %609 = vmatprep.subr.mxu0 0.0
      %610 = vmatpush1.xpose.msra.mxu0 %v582
      %611 = vmatprep.subr.mxu0 0.0
      %612 = vmatpush1.xpose.msra.mxu0 %v583
      %613 = vmatprep.subr.mxu0 0.0
      %614 = vmatpush1.xpose.msra.mxu0 %v584
      %615 = vmatprep.subr.mxu0 0.0
      %616 = vmatpush1.xpose.msra.mxu0 %v585
      %617 = vmatprep.subr.mxu0 0.0
      %618 = vmatpush1.xpose.msra.mxu0 %v586
      %619 = vmatprep.subr.mxu0 0.0
      %620 = vmatpush1.xpose.msra.mxu0 %v587
      %621 = vmatprep.subr.mxu0 0.0
      %622 = vmatpush1.xpose.msra.mxu0 %v588
      %623 = vmatprep.subr.mxu0 0.0
      %624 = vmatpush1.xpose.msra.mxu0 %v589
      %625 = vmatprep.subr.mxu0 0.0
      %626 = vmatpush1.xpose.msra.mxu0 %v590
      %627 = vmatprep.subr.mxu0 0.0
      %628 = vmatpush1.xpose.msra.mxu0 %v591
      %629 = vmatprep.subr.mxu0 0.0
      %630 = vmatpush1.xpose.msra.mxu0 %v592
      %631 = vmatprep.subr.mxu0 0.0
      %632 = vmatpush1.xpose.msra.mxu0 %v593
      %633 = vmatprep.subr.mxu0 0.0
      %634 = vmatpush1.xpose.msra.mxu0 0.0
      %635 = vmatprep.subr.mxu0 0.0
      %636 = vmatpush1.xpose.msra.mxu0 0.0
      %637 = vmatprep.subr.mxu0 0.0
      %638 = vmatpush1.xpose.msra.mxu0 0.0
      %639 = vmatprep.subr.mxu0 0.0
      %640 = vmatpush1.xpose.msra.mxu0 0.0
      %641 = vmatprep.subr.mxu0 0.0
      %642 = vmatpush1.xpose.msra.mxu0 0.0
      %643 = vmatprep.subr.mxu0 0.0
      %644 = vmatpush1.xpose.msra.mxu0 0.0
      %645 = vmatprep.subr.mxu0 0.0
      %646 = vmatpush1.xpose.msra.mxu0 0.0
      %647 = vmatprep.subr.mxu0 0.0
      %648 = vmatpush1.xpose.msra.mxu0 0.0
      %649 = vmatprep.subr.mxu0 0.0
      %650 = vmatpush1.xpose.msra.mxu0 0.0
      %651 = vmatprep.subr.mxu0 0.0
      %652 = vmatpush1.xpose.msra.mxu0 0.0
      %653 = vmatprep.subr.mxu0 0.0
      %654 = vmatpush1.xpose.msra.mxu0 0.0
      %655 = vmatprep.subr.mxu0 0.0
      %656 = vmatpush1.xpose.msra.mxu0 0.0
      %657 = vmatprep.subr.mxu0 0.0
      %658 = vmatpush1.xpose.msra.mxu0 0.0
      %659 = vmatprep.subr.mxu0 0.0
      %660 = vmatpush1.xpose.msra.mxu0 0.0
      %661 = vmatprep.subr.mxu0 0.0
      %662 = vmatpush1.xpose.msra.mxu0 0.0
      %663 = vmatprep.subr.mxu0 0.0
      %664 = vmatpush1.xpose.msra.mxu0 0.0
      %665 = vmatprep.mubr.f32.mxu0 0.0
      %666 = vmatmul.mubr.f32.gmra.mrb[0].mxu0 %v577
      %v667 = vpop.f32.mrb[0].mxu0
      %v668 = vadd.f32 %v599, %v667
      %v669 = vpop.f32.mrb[0].mxu0
      %670 = vdwg.mxu0
      %671 = vmax.xlane.f32.xlu0 %v668
      %v672 = vpop.xlane.xlu0 %671
      %v673 = vsub.f32 %v668, %v672
      %v674 = vmul.f32 %v673, 1.442695
      %v675 = vpow.pop %v674
      %676 = vadd.xlane.f32.xlu0 %v675
      %v677 = vpop.xlane.xlu0 %676
      %v678 = vrcp.pop %v677
      %v679 = vmul.f32 %v675, %v678
      %680 = vst [vmem:[%s4] sm:$0xff] %v679
    $region29: #{forward.1} parent=1 // pred_fallthru
      _
    // Predicated region
    $region30: #{forward.1} parent=1 // pred_check
      _
    $region31: #{forward.1} parent=1 // pred_check_branch
      %682 = sbr.rel (0) target = $region33
    $region32: #{forward.1} parent=1 // pred_region
      _
    $region33: #{forward.1} parent=1 // pred_fallthru
      _
    // Predicated region
    $region34: #{forward.1} parent=1 // pred_check
      _
    $region35: #{forward.1} parent=1 // pred_check_branch
      %684 = sbr.rel (0) target = $region37
    $region36: #{forward.1} parent=1 // pred_region
      _
    $region37: #{forward.1} parent=1 // pred_fallthru
      _
    %685 = vsyncpa [#allocation4], 1

</llo_original>
